<compile_context>
chip_gen: v6e
topology: v6e:2x2x1
jax: 0.10.0
libtpu: 0.0.40
codegen_flags: <defaults>
</compile_context>

<pallas_src>
import functools

import jax
import jax.numpy as jnp
from jax import lax
from jax.experimental import pallas as pl
from jax.experimental.pallas import tpu as pltpu

NUM_AGENTS = 4
VIBE_DIM = 64
FINAL_VIBE_DIM = NUM_AGENTS * VIBE_DIM  # 256
GENERIC_IN_DIM = 10
ODE_STEPS = 4
ODE_DT = 1.0 / ODE_STEPS
OUT_PAD = 128  # lane-dense output width; column 0 carries the regression result


def _round_up(x, m):
    return ((x + m - 1) // m) * m


def _tanh_in_bf16():
    """bf16 EUP only exists (and only helps) on v6e / v7x."""
    try:
        kind = jax.devices()[0].device_kind.lower()
    except Exception:  # pragma: no cover - defensive; default to the safe f32 path
        return False
    return ("v6" in kind) or ("v7" in kind)


def fluid_kernel(x_ref, wg_ref, bg_ref, wcomb_ref, bode_ref, wreg_ref, breg_ref,
                 out_ref, *, tanh_bf16):
    # ---- generic_projector: Linear(10, 256); tiny K, kept in f32 ----
    v = (jnp.dot(x_ref[...], wg_ref[...], preferred_element_type=jnp.float32)
         + bg_ref[...])                                              # (TB, 256) f32

    w_comb = wcomb_ref[...]          # (256, 256) bf16, cast once in the wrapper
    b_ode = bode_ref[...]            # (1, 256) f32, reused across output vregs

    # ---- V1_GraphODE (Euler): one lane-dense bf16 MXU matmul per step ----
    # The fully-connected-graph message aggregation and W_self/W_msg are folded
    # into w_comb (diag blocks = W_self, off-diag = W_msg/(N-1)) by the wrapper.
    def ode_step(_, v):
        pre = jnp.dot(v.astype(jnp.bfloat16), w_comb,
                      preferred_element_type=jnp.float32) + b_ode
        if tanh_bf16:
            dv = jnp.tanh(pre.astype(jnp.bfloat16)).astype(jnp.float32)
        else:
            dv = jnp.tanh(pre)
        return v + ODE_DT * dv                                       # f32 update

    v = lax.fori_loop(0, ODE_STEPS, ode_step, v, unroll=True)

    # ---- regression_head: Linear(256, 1); bf16 MXU matmul (f32 acc), lane-padded
    #      to 128 columns so the output store is a full unmasked vst.  The wrapper
    #      slices column 0. ----
    out_ref[...] = (jnp.dot(v.astype(jnp.bfloat16), wreg_ref[...],
                            preferred_element_type=jnp.float32)
                    + breg_ref[...])                                 # (TB, 128)


def fluid_network_forward(x, params, tile_b=2048,
                          vmem_limit_bytes=48 * 1024 * 1024):
    """Fused forward pass for pillar_id == 3 (generic -> graph ODE -> regression)."""
    b = x.shape[0]
    # tile_b is always a multiple of 8 (BlockSpec (8,128) rule), capped by batch.
    tb = min(_round_up(tile_b, 8), _round_up(b, 8))
    # Megacore: avoid a single-tile grid for non-trivial batches so the
    # "parallel" batch axis can shard across both v7x TensorCores.
    if _round_up(b, tb) == tb and b > 8:
        tb = _round_up((tb + 1) // 2, 8)
    padded_b = _round_up(b, tb)
    if padded_b != b:
        x = jnp.pad(x, ((0, padded_b - b), (0, 0)))
    x = x.astype(jnp.float32)

    # Fold per-agent self/message weights + normalized adjacency into one 256x256
    # block matrix (single lane-dense MXU matmul per ODE step); cast to bf16 here
    # so the kernel never re-casts it and its DMA / double-buffer is halved.
    eye = jnp.eye(NUM_AGENTS, dtype=jnp.float32)
    off = (jnp.ones((NUM_AGENTS, NUM_AGENTS), jnp.float32) - eye) / (NUM_AGENTS - 1)
    w_comb = (jnp.kron(eye, params["w_self"])
              + jnp.kron(off, params["w_msg"])).astype(jnp.bfloat16)
    b_ode_tiled = jnp.tile(params["b_ode"], (1, NUM_AGENTS))          # (1, 256) f32

    # Lane-dense regression head: pad the single output column to 128 lanes and
    # pre-cast to bf16.
    w_reg_pad = jnp.pad(params["w_reg"],
                        ((0, 0), (0, OUT_PAD - 1))).astype(jnp.bfloat16)  # (256,128)
    b_reg_pad = jnp.pad(params["b_reg"], ((0, 0), (0, OUT_PAD - 1)))      # (1, 128)

    grid = (padded_b // tb,)
    batch_map = lambda i: (i, 0)
    fixed_map = lambda i: (0, 0)

    flops = padded_b * (2 * GENERIC_IN_DIM * FINAL_VIBE_DIM
                        + ODE_STEPS * 2 * FINAL_VIBE_DIM * FINAL_VIBE_DIM
                        + 2 * FINAL_VIBE_DIM * OUT_PAD)
    bytes_accessed = (4 * padded_b * (GENERIC_IN_DIM + OUT_PAD)
                      + 4 * (GENERIC_IN_DIM * FINAL_VIBE_DIM + FINAL_VIBE_DIM
                             + FINAL_VIBE_DIM + OUT_PAD)
                      + 2 * (FINAL_VIBE_DIM * FINAL_VIBE_DIM
                             + FINAL_VIBE_DIM * OUT_PAD))

    kernel = functools.partial(fluid_kernel, tanh_bf16=_tanh_in_bf16())

    out_padded = pl.pallas_call(
        kernel,
        out_shape=jax.ShapeDtypeStruct((padded_b, OUT_PAD), jnp.float32),
        grid_spec=pltpu.PrefetchScalarGridSpec(
            num_scalar_prefetch=0,
            grid=grid,
            in_specs=[
                pl.BlockSpec((tb, GENERIC_IN_DIM), batch_map),              # x tile
                pl.BlockSpec((GENERIC_IN_DIM, FINAL_VIBE_DIM), fixed_map),  # w_gen
                pl.BlockSpec((1, FINAL_VIBE_DIM), fixed_map),               # b_gen
                pl.BlockSpec((FINAL_VIBE_DIM, FINAL_VIBE_DIM), fixed_map),  # w_comb
                pl.BlockSpec((1, FINAL_VIBE_DIM), fixed_map),               # b_ode
                pl.BlockSpec((FINAL_VIBE_DIM, OUT_PAD), fixed_map),         # w_reg
                pl.BlockSpec((1, OUT_PAD), fixed_map),                      # b_reg
            ],
            out_specs=pl.BlockSpec((tb, OUT_PAD), batch_map),
        ),
        compiler_params=pltpu.CompilerParams(
            dimension_semantics=("parallel",),
            vmem_limit_bytes=vmem_limit_bytes,
        ),
        cost_estimate=pl.CostEstimate(
            flops=flops,
            transcendentals=padded_b * ODE_STEPS * FINAL_VIBE_DIM,
            bytes_accessed=bytes_accessed,
        ),
    )(x, params["w_gen"], params["b_gen"], w_comb, b_ode_tiled,
      w_reg_pad, b_reg_pad)

    return out_padded[:b, :1]


def fluid_network_reference(x, params):
    """Pure-JAX f32 reference mirroring the PyTorch forward semantics."""
    v_flat = x.astype(jnp.float32) @ params["w_gen"] + params["b_gen"]   # (B, 256)
    b = x.shape[0]
    v = v_flat.reshape(b, NUM_AGENTS, VIBE_DIM)
    adj = params["adj"]

    def graph_ode(v_b):  # v_b: (NUM_AGENTS, VIBE_DIM), per batch element
        for _ in range(ODE_STEPS):
            msg = adj @ v_b
            dv = jnp.tanh(v_b @ params["w_self"] + msg @ params["w_msg"]
                          + params["b_ode"])
            v_b = v_b + ODE_DT * dv
        return v_b

    final = jnp.stack([graph_ode(v[i]) for i in range(b)])               # (B, 4, 64)
    final_flat = final.reshape(b, FINAL_VIBE_DIM)
    return final_flat @ params["w_reg"] + params["b_reg"]                # (B, 1)


def make_params(key):
    ks = jax.random.split(key, 6)
    scale = 0.1
    # Fully connected NUM_AGENTS graph, no self loops, row-normalized.
    adj = (jnp.ones((NUM_AGENTS, NUM_AGENTS), jnp.float32)
           - jnp.eye(NUM_AGENTS, dtype=jnp.float32)) / (NUM_AGENTS - 1)
    return {
        "w_gen": scale * jax.random.normal(ks[0], (GENERIC_IN_DIM, FINAL_VIBE_DIM),
                                           jnp.float32),
        "b_gen": scale * jax.random.normal(ks[1], (1, FINAL_VIBE_DIM), jnp.float32),
        "adj": adj,
        "w_self": scale * jax.random.normal(ks[2], (VIBE_DIM, VIBE_DIM), jnp.float32),
        "w_msg": scale * jax.random.normal(ks[3], (VIBE_DIM, VIBE_DIM), jnp.float32),
        "b_ode": scale * jax.random.normal(ks[4], (1, VIBE_DIM), jnp.float32),
        "w_reg": scale * jax.random.normal(ks[5], (FINAL_VIBE_DIM, 1), jnp.float32),
        "b_reg": jnp.zeros((1, 1), jnp.float32),
    }


if __name__ == "__main__":
    key = jax.random.PRNGKey(0)
    k_x, k_p, k_x2, k_x3 = jax.random.split(key, 4)
    params = make_params(k_p)

    # Small single-tile case (batch = 2, padded to one 8-row tile).
    BATCH = 2
    x = jax.random.normal(k_x, (BATCH, GENERIC_IN_DIM), jnp.float32)
    out = jax.block_until_ready(fluid_network_forward(x, params))
    ref = fluid_network_reference(x, params)
    assert out.shape == (BATCH, 1)
    assert jnp.allclose(out, ref, atol=3e-2, rtol=3e-2), (out, ref)

    # Multi-tile grid case (batch = 20, tile_b = 8 -> grid of 3 tiles + padding).
    BATCH2 = 20
    x2 = jax.random.normal(k_x2, (BATCH2, GENERIC_IN_DIM), jnp.float32)
    out2 = jax.block_until_ready(fluid_network_forward(x2, params, tile_b=8))
    ref2 = fluid_network_reference(x2, params)
    assert out2.shape == (BATCH2, 1)
    assert jnp.allclose(out2, ref2, atol=3e-2, rtol=3e-2), (out2, ref2)

    # Default tile path (batch = 20, default tile_b) -> 2-tile grid for megacore,
    # exercises the non-multiple-of-8 padding + tile-split heuristic.
    x3 = jax.random.normal(k_x3, (BATCH2, GENERIC_IN_DIM), jnp.float32)
    out3 = jax.block_until_ready(fluid_network_forward(x3, params))
    ref3 = fluid_network_reference(x3, params)
    assert out3.shape == (BATCH2, 1)
    assert jnp.allclose(out3, ref3, atol=3e-2, rtol=3e-2), (out3, ref3)

    print("KERNEL_OK")
</pallas_src>

<mosaic_0001>
module attributes {stable_mosaic.version = 11 : i64} {
  func.func @fluid_kernel(%arg0: i32, %arg1: memref<8x10xf32, #tpu.memory_space<vmem>>, %arg2: memref<10x256xf32, #tpu.memory_space<vmem>>, %arg3: memref<1x256xf32, #tpu.memory_space<vmem>>, %arg4: memref<256x256xbf16, #tpu.memory_space<vmem>>, %arg5: memref<1x256xf32, #tpu.memory_space<vmem>>, %arg6: memref<256x128xbf16, #tpu.memory_space<vmem>>, %arg7: memref<1x128xf32, #tpu.memory_space<vmem>>, %arg8: memref<8x128xf32, #tpu.memory_space<vmem>>) attributes {dimension_semantics = [#tpu.dimension_semantics<parallel>], iteration_bounds = array<i64: 1>, scalar_prefetch = 0 : i64, scratch_operands = 0 : i64, tpu.core_type = #tpu.core_type<tc>, window_params = [{transform_indices = @transform_0, window_bounds = array<i64: 8, 10>}, {pipeline_mode = #tpu.pipeline_mode<synchronous>, transform_indices = @transform_1, window_bounds = array<i64: 10, 256>}, {pipeline_mode = #tpu.pipeline_mode<synchronous>, transform_indices = @transform_2, window_bounds = array<i64: 1, 256>}, {pipeline_mode = #tpu.pipeline_mode<synchronous>, transform_indices = @transform_3, window_bounds = array<i64: 256, 256>}, {pipeline_mode = #tpu.pipeline_mode<synchronous>, transform_indices = @transform_4, window_bounds = array<i64: 1, 256>}, {pipeline_mode = #tpu.pipeline_mode<synchronous>, transform_indices = @transform_5, window_bounds = array<i64: 256, 128>}, {pipeline_mode = #tpu.pipeline_mode<synchronous>, transform_indices = @transform_6, window_bounds = array<i64: 1, 128>}, {transform_indices = @transform_7, window_bounds = array<i64: 8, 128>}]} {
    %c0 = arith.constant 0 : index
    %c0_0 = arith.constant 0 : index
    %0 = vector.load %arg1[%c0, %c0_0] : memref<8x10xf32, #tpu.memory_space<vmem>>, vector<8x10xf32>
    %c0_1 = arith.constant 0 : index
    %c0_2 = arith.constant 0 : index
    %1 = vector.load %arg2[%c0_1, %c0_2] : memref<10x256xf32, #tpu.memory_space<vmem>>, vector<10x256xf32>
    %cst = arith.constant dense<0.000000e+00> : vector<8x256xf32>
    %2 = tpu.matmul %0, %1, %cst {dimension_numbers = #tpu.dot_dimension_numbers<[1], [0], [0], [1], [0, 0, 1, 1], [], []>} : vector<8x10xf32>, vector<10x256xf32>, vector<8x256xf32> -> vector<8x256xf32>
    %c0_3 = arith.constant 0 : index
    %c0_4 = arith.constant 0 : index
    %3 = vector.load %arg3[%c0_3, %c0_4] : memref<1x256xf32, #tpu.memory_space<vmem>>, vector<1x256xf32>
    %4 = vector.broadcast %3 : vector<1x256xf32> to vector<8x256xf32>
    %5 = arith.addf %2, %4 : vector<8x256xf32>
    %c0_5 = arith.constant 0 : index
    %c0_6 = arith.constant 0 : index
    %6 = vector.load %arg4[%c0_5, %c0_6] : memref<256x256xbf16, #tpu.memory_space<vmem>>, vector<256x256xbf16>
    %c0_7 = arith.constant 0 : index
    %c0_8 = arith.constant 0 : index
    %7 = vector.load %arg5[%c0_7, %c0_8] : memref<1x256xf32, #tpu.memory_space<vmem>>, vector<1x256xf32>
    %c0_i32 = arith.constant 0 : i32
    %8 = arith.truncf %5 : vector<8x256xf32> to vector<8x256xbf16>
    %cst_9 = arith.constant dense<0.000000e+00> : vector<8x256xf32>
    %9 = tpu.matmul %8, %6, %cst_9 {dimension_numbers = #tpu.dot_dimension_numbers<[1], [0], [0], [1], [0, 0, 1, 1], [], []>} : vector<8x256xbf16>, vector<256x256xbf16>, vector<8x256xf32> -> vector<8x256xf32>
    %10 = vector.broadcast %7 : vector<1x256xf32> to vector<8x256xf32>
    %11 = arith.addf %9, %10 : vector<8x256xf32>
    %12 = math.tanh %11 : vector<8x256xf32>
    %cst_10 = arith.constant 2.500000e-01 : f32
    %13 = vector.broadcast %cst_10 : f32 to vector<8x256xf32>
    %14 = arith.mulf %13, %12 : vector<8x256xf32>
    %15 = arith.addf %5, %14 : vector<8x256xf32>
    %c1_i32 = arith.constant 1 : i32
    %16 = arith.truncf %15 : vector<8x256xf32> to vector<8x256xbf16>
    %cst_11 = arith.constant dense<0.000000e+00> : vector<8x256xf32>
    %17 = tpu.matmul %16, %6, %cst_11 {dimension_numbers = #tpu.dot_dimension_numbers<[1], [0], [0], [1], [0, 0, 1, 1], [], []>} : vector<8x256xbf16>, vector<256x256xbf16>, vector<8x256xf32> -> vector<8x256xf32>
    %18 = vector.broadcast %7 : vector<1x256xf32> to vector<8x256xf32>
    %19 = arith.addf %17, %18 : vector<8x256xf32>
    %20 = math.tanh %19 : vector<8x256xf32>
    %cst_12 = arith.constant 2.500000e-01 : f32
    %21 = vector.broadcast %cst_12 : f32 to vector<8x256xf32>
    %22 = arith.mulf %21, %20 : vector<8x256xf32>
    %23 = arith.addf %15, %22 : vector<8x256xf32>
    %c2_i32 = arith.constant 2 : i32
    %24 = arith.truncf %23 : vector<8x256xf32> to vector<8x256xbf16>
    %cst_13 = arith.constant dense<0.000000e+00> : vector<8x256xf32>
    %25 = tpu.matmul %24, %6, %cst_13 {dimension_numbers = #tpu.dot_dimension_numbers<[1], [0], [0], [1], [0, 0, 1, 1], [], []>} : vector<8x256xbf16>, vector<256x256xbf16>, vector<8x256xf32> -> vector<8x256xf32>
    %26 = vector.broadcast %7 : vector<1x256xf32> to vector<8x256xf32>
    %27 = arith.addf %25, %26 : vector<8x256xf32>
    %28 = math.tanh %27 : vector<8x256xf32>
    %cst_14 = arith.constant 2.500000e-01 : f32
    %29 = vector.broadcast %cst_14 : f32 to vector<8x256xf32>
    %30 = arith.mulf %29, %28 : vector<8x256xf32>
    %31 = arith.addf %23, %30 : vector<8x256xf32>
    %c3_i32 = arith.constant 3 : i32
    %32 = arith.truncf %31 : vector<8x256xf32> to vector<8x256xbf16>
    %cst_15 = arith.constant dense<0.000000e+00> : vector<8x256xf32>
    %33 = tpu.matmul %32, %6, %cst_15 {dimension_numbers = #tpu.dot_dimension_numbers<[1], [0], [0], [1], [0, 0, 1, 1], [], []>} : vector<8x256xbf16>, vector<256x256xbf16>, vector<8x256xf32> -> vector<8x256xf32>
    %34 = vector.broadcast %7 : vector<1x256xf32> to vector<8x256xf32>
    %35 = arith.addf %33, %34 : vector<8x256xf32>
    %36 = math.tanh %35 : vector<8x256xf32>
    %cst_16 = arith.constant 2.500000e-01 : f32
    %37 = vector.broadcast %cst_16 : f32 to vector<8x256xf32>
    %38 = arith.mulf %37, %36 : vector<8x256xf32>
    %39 = arith.addf %31, %38 : vector<8x256xf32>
    %40 = arith.truncf %39 : vector<8x256xf32> to vector<8x256xbf16>
    %c0_17 = arith.constant 0 : index
    %c0_18 = arith.constant 0 : index
    %41 = vector.load %arg6[%c0_17, %c0_18] : memref<256x128xbf16, #tpu.memory_space<vmem>>, vector<256x128xbf16>
    %cst_19 = arith.constant dense<0.000000e+00> : vector<8x128xf32>
    %42 = tpu.matmul %40, %41, %cst_19 {dimension_numbers = #tpu.dot_dimension_numbers<[1], [0], [0], [1], [0, 0, 1, 1], [], []>} : vector<8x256xbf16>, vector<256x128xbf16>, vector<8x128xf32> -> vector<8x128xf32>
    %c0_20 = arith.constant 0 : index
    %c0_21 = arith.constant 0 : index
    %43 = vector.load %arg7[%c0_20, %c0_21] : memref<1x128xf32, #tpu.memory_space<vmem>>, vector<1x128xf32>
    %44 = vector.broadcast %43 : vector<1x128xf32> to vector<8x128xf32>
    %45 = arith.addf %42, %44 : vector<8x128xf32>
    %c0_22 = arith.constant 0 : index
    %c0_23 = arith.constant 0 : index
    %46 = vector.load %arg8[%c0_22, %c0_23] : memref<8x128xf32, #tpu.memory_space<vmem>>, vector<8x128xf32>
    tpu.vector_store %arg8[%c0_22, %c0_23], %45 {strides = array<i32>} : memref<8x128xf32, #tpu.memory_space<vmem>>, vector<8x128xf32>,
    return
  }
  func.func @transform_0(%arg0: i32) -> (i32, i32) {
    %c0_i32 = arith.constant 0 : i32
    %c0_i32_0 = arith.constant 0 : i32
    return %arg0, %c0_i32 : i32, i32
  }
  func.func @transform_1(%arg0: i32) -> (i32, i32) {
    %c0_i32 = arith.constant 0 : i32
    %c0_i32_0 = arith.constant 0 : i32
    %c0_i32_1 = arith.constant 0 : i32
    return %c0_i32, %c0_i32_0 : i32, i32
  }
  func.func @transform_2(%arg0: i32) -> (i32, i32) {
    %c0_i32 = arith.constant 0 : i32
    %c0_i32_0 = arith.constant 0 : i32
    %c0_i32_1 = arith.constant 0 : i32
    return %c0_i32, %c0_i32_0 : i32, i32
  }
  func.func @transform_3(%arg0: i32) -> (i32, i32) {
    %c0_i32 = arith.constant 0 : i32
    %c0_i32_0 = arith.constant 0 : i32
    %c0_i32_1 = arith.constant 0 : i32
    return %c0_i32, %c0_i32_0 : i32, i32
  }
  func.func @transform_4(%arg0: i32) -> (i32, i32) {
    %c0_i32 = arith.constant 0 : i32
    %c0_i32_0 = arith.constant 0 : i32
    %c0_i32_1 = arith.constant 0 : i32
    return %c0_i32, %c0_i32_0 : i32, i32
  }
  func.func @transform_5(%arg0: i32) -> (i32, i32) {
    %c0_i32 = arith.constant 0 : i32
    %c0_i32_0 = arith.constant 0 : i32
    %c0_i32_1 = arith.constant 0 : i32
    return %c0_i32, %c0_i32_0 : i32, i32
  }
  func.func @transform_6(%arg0: i32) -> (i32, i32) {
    %c0_i32 = arith.constant 0 : i32
    %c0_i32_0 = arith.constant 0 : i32
    %c0_i32_1 = arith.constant 0 : i32
    return %c0_i32, %c0_i32_0 : i32, i32
  }
  func.func @transform_7(%arg0: i32) -> (i32, i32) {
    %c0_i32 = arith.constant 0 : i32
    %c0_i32_0 = arith.constant 0 : i32
    return %arg0, %c0_i32 : i32, i32
  }
}

</mosaic_0001>

<llo_original>
// kernel: tpu_custom_call.1
$region0: #{tpu_custom_call.1}
  #allocation0 [shape = 'u32[]', space=smem, size = 0x4, offset = 0x4, fixed_abs, tag = 'smem constant byte address 0x4 - core index']
  #allocation1 [shape = 'u32[144,128]{1,0:T(1,128)}', space=vmem, size = 0x12000, scoped, tag = 'internal scratch']
  %s0 = inlined_call_operand.hbm [shape: f32[8,10], index: 0, kind: input, shape index: {}]
  %s1 = inlined_call_operand.hbm [shape: f32[10,256], index: 1, kind: input, shape index: {}]
  %s2 = inlined_call_operand.vmem [shape: f32[1,256], index: 2, kind: input, shape index: {}]
  %s3 = inlined_call_operand.hbm [shape: bf16[256,256], index: 3, kind: input, shape index: {}]
  %s4 = inlined_call_operand.vmem [shape: f32[1,256], index: 4, kind: input, shape index: {}]
  %s5 = inlined_call_operand.hbm [shape: bf16[256,128], index: 5, kind: input, shape index: {}]
  %s6 = inlined_call_operand.vmem [shape: f32[1,128], index: 6, kind: input, shape index: {}]
  %s7 = inlined_call_operand.hbm [shape: f32[8,128], index: 7, kind: output, shape index: {}]
  %s8 = sld [smem:[#allocation0]]
  $region54: #{tpu_custom_call.1} parent=0
    _
  %s10 = ssub.s32 1, %s8
  %s11 = scalar_select 0, %s10, %s8
  $region1: #{tpu_custom_call.1} parent=0
    #allocation2 [shape = 'u8[4096]{0}', space=vmem, size = 0x1000, scoped, tag = 'input window, operand 0, single buffered']
    #allocation3 [shape = 's32[1]{0}', space=sflag, size = 0x4, scoped, tag = 'scoped memory for tpu_custom_call.1']
    #allocation4 [shape = 's32[1]{0}', space=sflag, size = 0x4, scoped, tag = 'scoped memory for tpu_custom_call.1']
    #allocation5 [shape = 'u8[16384]{0}', space=vmem, size = 0x4000, scoped, tag = 'input window, operand 1, single buffered']
    #allocation6 [shape = 's32[1]{0}', space=sflag, size = 0x4, scoped, tag = 'scoped memory for tpu_custom_call.1']
    #allocation7 [shape = 'u8[131072]{0}', space=vmem, size = 0x20000, scoped, tag = 'input window, operand 3, single buffered']
    #allocation8 [shape = 'u8[65536]{0}', space=vmem, size = 0x10000, scoped, tag = 'input window, operand 5, single buffered']
    #allocation9 [shape = 's32[1]{0}', space=sflag, size = 0x4, scoped, tag = 'scoped memory for tpu_custom_call.1']
    #allocation10 [shape = 'u8[4096]{0}', space=vmem, size = 0x1000, scoped, tag = 'output window, operand 0, single buffered']
    %12 = vsyncpa [#allocation3], 0
    %13 = vsyncpa [#allocation6], 0
    %14 = vsyncpa [#allocation9], 0
    %15 = vsyncpa [#allocation4], 0
    // Predicated region
    $region2: #{tpu_custom_call.1} parent=1 // pred_check
      _
    $region3: #{tpu_custom_call.1} parent=1 // pred_check_branch
      %17 = sbr.rel (0) target = $region5
    $region4: #{tpu_custom_call.1} parent=1 // pred_region
      %s19 = ssub.s32 128, 128
      %20 = vsyncadd [#allocation3], %s19
      %s22 = sshll.u32 [#allocation2], 4
      %s23 = int_to_ptr.vmem [resolvable:$true] %s22
      %25 = dma.hbm_to_vmem [thread:$0]  %s0, 128, %s23, [#allocation3]
    $region5: #{tpu_custom_call.1} parent=1 // pred_fallthru
      _
    // Predicated region
    $region6: #{tpu_custom_call.1} parent=1 // pred_check
      _
    $region7: #{tpu_custom_call.1} parent=1 // pred_check_branch
      %27 = sbr.rel (0) target = $region9
    $region8: #{tpu_custom_call.1} parent=1 // pred_region
      %s29 = ssub.s32 512, 512
      %30 = vsyncadd [#allocation6], %s29
      %s31 = sshll.u32 [#allocation5], 4
      %s32 = int_to_ptr.vmem [resolvable:$true] %s31
      %37 = dma.hbm_to_vmem [thread:$0]  %s1, 512, %s32, [#allocation6], 256, 256, 16
    $region9: #{tpu_custom_call.1} parent=1 // pred_fallthru
      _
    // Predicated region
    $region10: #{tpu_custom_call.1} parent=1 // pred_check
      _
    $region11: #{tpu_custom_call.1} parent=1 // pred_check_branch
      %39 = sbr.rel (0) target = $region13
    $region12: #{tpu_custom_call.1} parent=1 // pred_region
      _
    $region13: #{tpu_custom_call.1} parent=1 // pred_fallthru
      _
    // Predicated region
    $region14: #{tpu_custom_call.1} parent=1 // pred_check
      _
    $region15: #{tpu_custom_call.1} parent=1 // pred_check_branch
      %41 = sbr.rel (0) target = $region17
    $region16: #{tpu_custom_call.1} parent=1 // pred_region
      %s43 = ssub.s32 4096, 4096
      %44 = vsyncadd [#allocation6], %s43
      %s45 = sshll.u32 [#allocation7], 4
      %s46 = int_to_ptr.vmem [resolvable:$true] %s45
      %51 = dma.hbm_to_vmem [thread:$0]  %s3, 4096, %s46, [#allocation6], 128, 128, 8
    $region17: #{tpu_custom_call.1} parent=1 // pred_fallthru
      _
    // Predicated region
    $region18: #{tpu_custom_call.1} parent=1 // pred_check
      _
    $region19: #{tpu_custom_call.1} parent=1 // pred_check_branch
      %53 = sbr.rel (0) target = $region21
    $region20: #{tpu_custom_call.1} parent=1 // pred_region
      _
    $region21: #{tpu_custom_call.1} parent=1 // pred_fallthru
      _
    // Predicated region
    $region22: #{tpu_custom_call.1} parent=1 // pred_check
      _
    $region23: #{tpu_custom_call.1} parent=1 // pred_check_branch
      %55 = sbr.rel (0) target = $region25
    $region24: #{tpu_custom_call.1} parent=1 // pred_region
      %s57 = ssub.s32 2048, 2048
      %58 = vsyncadd [#allocation9], %s57
      %s59 = sshll.u32 [#allocation8], 4
      %s60 = int_to_ptr.vmem [resolvable:$true] %s59
      %65 = dma.hbm_to_vmem [thread:$0]  %s5, 2048, %s60, [#allocation9], 64, 64, 4
    $region25: #{tpu_custom_call.1} parent=1 // pred_fallthru
      _
    // Predicated region
    $region26: #{tpu_custom_call.1} parent=1 // pred_check
      _
    $region27: #{tpu_custom_call.1} parent=1 // pred_check_branch
      %67 = sbr.rel (0) target = $region29
    $region28: #{tpu_custom_call.1} parent=1 // pred_region
      _
    $region29: #{tpu_custom_call.1} parent=1 // pred_fallthru
      _
    // Predicated region
    $region30: #{tpu_custom_call.1} parent=1 // pred_check
      _
    $region31: #{tpu_custom_call.1} parent=1 // pred_check_branch
      %69 = sbr.rel (0) target = $region33
    $region32: #{tpu_custom_call.1} parent=1 // pred_region
      %70 = dma.done [#allocation3], 128
    $region33: #{tpu_custom_call.1} parent=1 // pred_fallthru
      _
    // Predicated region
    $region34: #{tpu_custom_call.1} parent=1 // pred_check
      _
    $region35: #{tpu_custom_call.1} parent=1 // pred_check_branch
      %72 = sbr.rel (0) target = $region37
    $region36: #{tpu_custom_call.1} parent=1 // pred_region
      %73 = dma.done [#allocation6], 512
    $region37: #{tpu_custom_call.1} parent=1 // pred_fallthru
      _
    // Predicated region
    $region38: #{tpu_custom_call.1} parent=1 // pred_check
      _
    $region39: #{tpu_custom_call.1} parent=1 // pred_check_branch
      %75 = sbr.rel (0) target = $region41
    $region40: #{tpu_custom_call.1} parent=1 // pred_region
      %76 = dma.done [#allocation6], 4096
    $region41: #{tpu_custom_call.1} parent=1 // pred_fallthru
      _
    // Predicated region
    $region42: #{tpu_custom_call.1} parent=1 // pred_check
      _
    $region43: #{tpu_custom_call.1} parent=1 // pred_check_branch
      %78 = sbr.rel (0) target = $region45
    $region44: #{tpu_custom_call.1} parent=1 // pred_region
      %79 = dma.done [#allocation9], 2048
    $region45: #{tpu_custom_call.1} parent=1 // pred_fallthru
      _
    %v81 = vld [vmem:[#allocation2] sm:$0xff]
    %v82 = vld [vmem:[#allocation5] sm:$0xff]
    %v83 = vld [vmem:[#allocation5 + $0x8] sm:$0xff]
    %v84 = vld [vmem:[#allocation5 + $0x10] sm:$0x3]
    %v85 = vld [vmem:[#allocation5 + $0x18] sm:$0x3]
    %v86 = vld [vmem:[%s2] sm:$0x3]
    %v88 = vlaneseq
    %v89 = vshrl.u32 %v88, 7
    %v90 = vsub.s32 0, %v89
    %v91 = vrot.slane %v86, %v90
    %v92 = vlaneseq
    %v93 = vshrl.u32 %v92, 7
    %v94 = vsub.s32 1, %v93
    %v95 = vrot.slane %v86, %v94
    %vm98 = vcmask 80896
    %v100 = vsel %vm98, %v81, 0
    %vm102 = vcmask 1041408
    %v104 = vsel %vm102, %v84, 0
    %v107 = vsel %vm102, %v85, 0
    %109 = vmatprep.subr.mxu0 0.0
    %110 = vmatpush1.msra.mxu0 0.0
    %111 = vmatprep.subr.mxu0 0.0
    %112 = vmatpush1.msra.mxu0 0.0
    %113 = vmatprep.subr.mxu0 0.0
    %114 = vmatpush1.msra.mxu0 0.0
    %115 = vmatprep.subr.mxu0 0.0
    %116 = vmatpush1.msra.mxu0 0.0
    %117 = vmatprep.subr.mxu0 0.0
    %118 = vmatpush1.msra.mxu0 0.0
    %119 = vmatprep.subr.mxu0 0.0
    %120 = vmatpush1.msra.mxu0 0.0
    %121 = vmatprep.subr.mxu0 0.0
    %122 = vmatpush1.msra.mxu0 0.0
    %123 = vmatprep.subr.mxu0 0.0
    %124 = vmatpush1.msra.mxu0 0.0
    %125 = vmatprep.subr.mxu0 0.0
    %126 = vmatpush1.msra.mxu0 0.0
    %127 = vmatprep.subr.mxu0 0.0
    %128 = vmatpush1.msra.mxu0 0.0
    %129 = vmatprep.subr.mxu0 0.0
    %130 = vmatpush1.msra.mxu0 0.0
    %131 = vmatprep.subr.mxu0 0.0
    %132 = vmatpush1.msra.mxu0 0.0
    %133 = vmatprep.subr.mxu0 0.0
    %134 = vmatpush1.msra.mxu0 0.0
    %135 = vmatprep.subr.mxu0 0.0
    %136 = vmatpush1.msra.mxu0 0.0
    %137 = vmatprep.subr.mxu0 %v107
    %138 = vmatpush1.msra.mxu0 %v104
    %139 = vmatprep.subr.mxu0 %v83
    %140 = vmatpush1.msra.mxu0 %v82
    %141 = vmatprep.subr.mxu0 0.0
    %142 = vmatpush2.msra.mxu0 0.0
    %143 = vmatprep.subr.mxu0 0.0
    %144 = vmatpush2.msra.mxu0 0.0
    %145 = vmatprep.subr.mxu0 0.0
    %146 = vmatpush2.msra.mxu0 0.0
    %147 = vmatprep.subr.mxu0 0.0
    %148 = vmatpush2.msra.mxu0 0.0
    %149 = vmatprep.subr.mxu0 0.0
    %150 = vmatpush2.msra.mxu0 0.0
    %151 = vmatprep.subr.mxu0 0.0
    %152 = vmatpush2.msra.mxu0 0.0
    %153 = vmatprep.subr.mxu0 0.0
    %154 = vmatpush2.msra.mxu0 0.0
    %155 = vmatprep.subr.mxu0 0.0
    %156 = vmatpush2.msra.mxu0 0.0
    %157 = vmatprep.subr.mxu0 0.0
    %158 = vmatpush2.msra.mxu0 0.0
    %159 = vmatprep.subr.mxu0 0.0
    %160 = vmatpush2.msra.mxu0 0.0
    %161 = vmatprep.subr.mxu0 0.0
    %162 = vmatpush2.msra.mxu0 0.0
    %163 = vmatprep.subr.mxu0 0.0
    %164 = vmatpush2.msra.mxu0 0.0
    %165 = vmatprep.subr.mxu0 0.0
    %166 = vmatpush2.msra.mxu0 0.0
    %167 = vmatprep.subr.mxu0 0.0
    %168 = vmatpush2.msra.mxu0 0.0
    %169 = vmatprep.subr.mxu0 0.0
    %170 = vmatpush2.msra.mxu0 0.0
    %171 = vmatprep.subr.mxu0 0.0
    %172 = vmatpush2.msra.mxu0 0.0
    %173 = vmatprep.mubr.f32.mxu0 0.0
    %174 = vmatmul.mubr.f32.gmra.mxu0 %v100
    %v175 = vpop.f32.mrf.mxu0
    %v176 = vadd.f32 %v91, %v175
    %v177 = vpop.f32.mrf.mxu0
    %v178 = vadd.f32 %v95, %v177
    %179 = vdwg.mxu0
    %v180 = vld [vmem:[#allocation7] sm:$0xff]
    %v181 = vld [vmem:[#allocation7 + $0x8] sm:$0xff]
    %v182 = vld [vmem:[#allocation7 + $0x10] sm:$0xff]
    %v183 = vld [vmem:[#allocation7 + $0x18] sm:$0xff]
    %v184 = vld [vmem:[#allocation7 + $0x20] sm:$0xff]
    %v185 = vld [vmem:[#allocation7 + $0x28] sm:$0xff]
    %v186 = vld [vmem:[#allocation7 + $0x30] sm:$0xff]
    %v187 = vld [vmem:[#allocation7 + $0x38] sm:$0xff]
    %v188 = vld [vmem:[#allocation7 + $0x40] sm:$0xff]
    %v189 = vld [vmem:[#allocation7 + $0x48] sm:$0xff]
    %v190 = vld [vmem:[#allocation7 + $0x50] sm:$0xff]
    %v191 = vld [vmem:[#allocation7 + $0x58] sm:$0xff]
    %v192 = vld [vmem:[#allocation7 + $0x60] sm:$0xff]
    %v193 = vld [vmem:[#allocation7 + $0x68] sm:$0xff]
    %v194 = vld [vmem:[#allocation7 + $0x70] sm:$0xff]
    %v195 = vld [vmem:[#allocation7 + $0x78] sm:$0xff]
    %v196 = vld [vmem:[#allocation7 + $0x80] sm:$0xff]
    %v197 = vld [vmem:[#allocation7 + $0x88] sm:$0xff]
    %v198 = vld [vmem:[#allocation7 + $0x90] sm:$0xff]
    %v199 = vld [vmem:[#allocation7 + $0x98] sm:$0xff]
    %v200 = vld [vmem:[#allocation7 + $0xa0] sm:$0xff]
    %v201 = vld [vmem:[#allocation7 + $0xa8] sm:$0xff]
    %v202 = vld [vmem:[#allocation7 + $0xb0] sm:$0xff]
    %v203 = vld [vmem:[#allocation7 + $0xb8] sm:$0xff]
    %v204 = vld [vmem:[#allocation7 + $0xc0] sm:$0xff]
    %v205 = vld [vmem:[#allocation7 + $0xc8] sm:$0xff]
    %v206 = vld [vmem:[#allocation7 + $0xd0] sm:$0xff]
    %v207 = vld [vmem:[#allocation7 + $0xd8] sm:$0xff]
    %v208 = vld [vmem:[#allocation7 + $0xe0] sm:$0xff]
    %v209 = vld [vmem:[#allocation7 + $0xe8] sm:$0xff]
    %v210 = vld [vmem:[#allocation7 + $0xf0] sm:$0xff]
    %v211 = vld [vmem:[#allocation7 + $0xf8] sm:$0xff]
    %v212 = vld [vmem:[%s4] sm:$0x3]
    %v213 = vpack.c.bf16 %v176, %v176
    %v214 = vpack.c.bf16 %v178, %v178
    %v216 = vlaneseq
    %v217 = vshrl.u32 %v216, 7
    %v218 = vsub.s32 0, %v217
    %v219 = vrot.slane %v212, %v218
    %v220 = vlaneseq
    %v221 = vshrl.u32 %v220, 7
    %v222 = vsub.s32 1, %v221
    %v223 = vrot.slane %v212, %v222
    %v258 = vunpack.c.l.b16 %v180
    %v259 = vunpack.c.h.b16 %v180
    %v260 = vunpack.c.l.b16 %v181
    %v261 = vunpack.c.h.b16 %v181
    %v262 = vunpack.c.l.b16 %v182
    %v263 = vunpack.c.h.b16 %v182
    %v264 = vunpack.c.l.b16 %v183
    %v265 = vunpack.c.h.b16 %v183
    %v266 = vunpack.c.l.b16 %v184
    %v267 = vunpack.c.h.b16 %v184
    %v268 = vunpack.c.l.b16 %v185
    %v269 = vunpack.c.h.b16 %v185
    %v270 = vunpack.c.l.b16 %v186
    %v271 = vunpack.c.h.b16 %v186
    %v272 = vunpack.c.l.b16 %v187
    %v273 = vunpack.c.h.b16 %v187
    %v274 = vunpack.c.l.b16 %v188
    %v275 = vunpack.c.h.b16 %v188
    %v276 = vunpack.c.l.b16 %v189
    %v277 = vunpack.c.h.b16 %v189
    %v278 = vunpack.c.l.b16 %v190
    %v279 = vunpack.c.h.b16 %v190
    %v280 = vunpack.c.l.b16 %v191
    %v281 = vunpack.c.h.b16 %v191
    %v282 = vunpack.c.l.b16 %v192
    %v283 = vunpack.c.h.b16 %v192
    %v284 = vunpack.c.l.b16 %v193
    %v285 = vunpack.c.h.b16 %v193
    %v286 = vunpack.c.l.b16 %v194
    %v287 = vunpack.c.h.b16 %v194
    %v288 = vunpack.c.l.b16 %v195
    %v289 = vunpack.c.h.b16 %v195
    %v290 = vunpack.c.l.b16 %v196
    %v291 = vunpack.c.h.b16 %v196
    %v292 = vunpack.c.l.b16 %v197
    %v293 = vunpack.c.h.b16 %v197
    %v294 = vunpack.c.l.b16 %v198
    %v295 = vunpack.c.h.b16 %v198
    %v296 = vunpack.c.l.b16 %v199
    %v297 = vunpack.c.h.b16 %v199
    %v298 = vunpack.c.l.b16 %v200
    %v299 = vunpack.c.h.b16 %v200
    %v300 = vunpack.c.l.b16 %v201
    %v301 = vunpack.c.h.b16 %v201
    %v302 = vunpack.c.l.b16 %v202
    %v303 = vunpack.c.h.b16 %v202
    %v304 = vunpack.c.l.b16 %v203
    %v305 = vunpack.c.h.b16 %v203
    %v306 = vunpack.c.l.b16 %v204
    %v307 = vunpack.c.h.b16 %v204
    %v308 = vunpack.c.l.b16 %v205
    %v309 = vunpack.c.h.b16 %v205
    %v310 = vunpack.c.l.b16 %v206
    %v311 = vunpack.c.h.b16 %v206
    %v312 = vunpack.c.l.b16 %v207
    %v313 = vunpack.c.h.b16 %v207
    %v314 = vunpack.c.l.b16 %v208
    %v315 = vunpack.c.h.b16 %v208
    %v316 = vunpack.c.l.b16 %v209
    %v317 = vunpack.c.h.b16 %v209
    %v318 = vunpack.c.l.b16 %v210
    %v319 = vunpack.c.h.b16 %v210
    %v320 = vunpack.c.l.b16 %v211
    %v321 = vunpack.c.h.b16 %v211
    %v322 = vpack.c.b16 %v260, %v258
    %v323 = vpack.c.b16 %v261, %v259
    %v324 = vpack.c.b16 %v264, %v262
    %v325 = vpack.c.b16 %v265, %v263
    %v326 = vpack.c.b16 %v268, %v266
    %v327 = vpack.c.b16 %v269, %v267
    %v328 = vpack.c.b16 %v272, %v270
    %v329 = vpack.c.b16 %v273, %v271
    %v330 = vpack.c.b16 %v276, %v274
    %v331 = vpack.c.b16 %v277, %v275
    %v332 = vpack.c.b16 %v280, %v278
    %v333 = vpack.c.b16 %v281, %v279
    %v334 = vpack.c.b16 %v284, %v282
    %v335 = vpack.c.b16 %v285, %v283
    %v336 = vpack.c.b16 %v288, %v286
    %v337 = vpack.c.b16 %v289, %v287
    %v338 = vpack.c.b16 %v292, %v290
    %v339 = vpack.c.b16 %v293, %v291
    %v340 = vpack.c.b16 %v296, %v294
    %v341 = vpack.c.b16 %v297, %v295
    %v342 = vpack.c.b16 %v300, %v298
    %v343 = vpack.c.b16 %v301, %v299
    %v344 = vpack.c.b16 %v304, %v302
    %v345 = vpack.c.b16 %v305, %v303
    %v346 = vpack.c.b16 %v308, %v306
    %v347 = vpack.c.b16 %v309, %v307
    %v348 = vpack.c.b16 %v312, %v310
    %v349 = vpack.c.b16 %v313, %v311
    %v350 = vpack.c.b16 %v316, %v314
    %v351 = vpack.c.b16 %v317, %v315
    %v352 = vpack.c.b16 %v320, %v318
    %v353 = vpack.c.b16 %v321, %v319
    %386 = vmatprep.subr.bf16.mxu0 %v337
    %387 = vmatpush1.bf16.msra.mxu0 %v336
    %388 = vmatprep.subr.bf16.mxu0 %v335
    %389 = vmatpush1.bf16.msra.mxu0 %v334
    %390 = vmatprep.subr.bf16.mxu0 %v333
    %391 = vmatpush1.bf16.msra.mxu0 %v332
    %392 = vmatprep.subr.bf16.mxu0 %v331
    %393 = vmatpush1.bf16.msra.mxu0 %v330
    %394 = vmatprep.subr.bf16.mxu0 %v329
    %395 = vmatpush1.bf16.msra.mxu0 %v328
    %396 = vmatprep.subr.bf16.mxu0 %v327
    %397 = vmatpush1.bf16.msra.mxu0 %v326
    %398 = vmatprep.subr.bf16.mxu0 %v325
    %399 = vmatpush1.bf16.msra.mxu0 %v324
    %400 = vmatprep.subr.bf16.mxu0 %v323
    %401 = vmatpush1.bf16.msra.mxu0 %v322
    %402 = vmatprep.subr.bf16.mxu0 %v353
    %403 = vmatpush2.bf16.msra.mxu0 %v352
    %404 = vmatprep.subr.bf16.mxu0 %v351
    %405 = vmatpush2.bf16.msra.mxu0 %v350
    %406 = vmatprep.subr.bf16.mxu0 %v349
    %407 = vmatpush2.bf16.msra.mxu0 %v348
    %408 = vmatprep.subr.bf16.mxu0 %v347
    %409 = vmatpush2.bf16.msra.mxu0 %v346
    %410 = vmatprep.subr.bf16.mxu0 %v345
    %411 = vmatpush2.bf16.msra.mxu0 %v344
    %412 = vmatprep.subr.bf16.mxu0 %v343
    %413 = vmatpush2.bf16.msra.mxu0 %v342
    %414 = vmatprep.subr.bf16.mxu0 %v341
    %415 = vmatpush2.bf16.msra.mxu0 %v340
    %416 = vmatprep.subr.bf16.mxu0 %v339
    %417 = vmatpush2.bf16.msra.mxu0 %v338
    %418 = vmatprep.mubr.bf16.mxu0 %v214
    %419 = vmatmul.mubr.bf16.gmra.mxu0 %v213
    %v420 = vpop.f32.mrf.mxu0
    %v421 = vadd.f32 %v219, %v420
    %v422 = vpop.f32.mrf.mxu0
    %v423 = vadd.f32 %v223, %v422
    %v424 = vpop.f32.mrf.mxu0
    %v425 = vpop.f32.mrf.mxu0
    %426 = vdwg.mxu0
    %v427 = vtanh.pop %v421
    %v428 = vtanh.pop %v423
    %v429 = vmul.f32 %v427, 0.25
    %v430 = vmul.f32 %v428, 0.25
    %v431 = vadd.f32 %v176, %v429
    %v432 = vadd.f32 %v178, %v430
    %v433 = vpack.c.bf16 %v431, %v431
    %v434 = vpack.c.bf16 %v432, %v432
    %435 = vmatprep.subr.bf16.mxu0 %v337
    %436 = vmatpush1.bf16.msra.mxu0 %v336
    %437 = vmatprep.subr.bf16.mxu0 %v335
    %438 = vmatpush1.bf16.msra.mxu0 %v334
    %439 = vmatprep.subr.bf16.mxu0 %v333
    %440 = vmatpush1.bf16.msra.mxu0 %v332
    %441 = vmatprep.subr.bf16.mxu0 %v331
    %442 = vmatpush1.bf16.msra.mxu0 %v330
    %443 = vmatprep.subr.bf16.mxu0 %v329
    %444 = vmatpush1.bf16.msra.mxu0 %v328
    %445 = vmatprep.subr.bf16.mxu0 %v327
    %446 = vmatpush1.bf16.msra.mxu0 %v326
    %447 = vmatprep.subr.bf16.mxu0 %v325
    %448 = vmatpush1.bf16.msra.mxu0 %v324
    %449 = vmatprep.subr.bf16.mxu0 %v323
    %450 = vmatpush1.bf16.msra.mxu0 %v322
    %451 = vmatprep.subr.bf16.mxu0 %v353
    %452 = vmatpush2.bf16.msra.mxu0 %v352
    %453 = vmatprep.subr.bf16.mxu0 %v351
    %454 = vmatpush2.bf16.msra.mxu0 %v350
    %455 = vmatprep.subr.bf16.mxu0 %v349
    %456 = vmatpush2.bf16.msra.mxu0 %v348
    %457 = vmatprep.subr.bf16.mxu0 %v347
    %458 = vmatpush2.bf16.msra.mxu0 %v346
    %459 = vmatprep.subr.bf16.mxu0 %v345
    %460 = vmatpush2.bf16.msra.mxu0 %v344
    %461 = vmatprep.subr.bf16.mxu0 %v343
    %462 = vmatpush2.bf16.msra.mxu0 %v342
    %463 = vmatprep.subr.bf16.mxu0 %v341
    %464 = vmatpush2.bf16.msra.mxu0 %v340
    %465 = vmatprep.subr.bf16.mxu0 %v339
    %466 = vmatpush2.bf16.msra.mxu0 %v338
    %467 = vmatprep.mubr.bf16.mxu0 %v434
    %468 = vmatmul.mubr.bf16.gmra.mxu0 %v433
    %v469 = vpop.f32.mrf.mxu0
    %v470 = vadd.f32 %v219, %v469
    %v471 = vpop.f32.mrf.mxu0
    %v472 = vadd.f32 %v223, %v471
    %v473 = vpop.f32.mrf.mxu0
    %v474 = vpop.f32.mrf.mxu0
    %475 = vdwg.mxu0
    %v476 = vtanh.pop %v470
    %v477 = vtanh.pop %v472
    %v478 = vmul.f32 %v476, 0.25
    %v479 = vmul.f32 %v477, 0.25
    %v480 = vadd.f32 %v431, %v478
    %v481 = vadd.f32 %v432, %v479
    %v482 = vpack.c.bf16 %v480, %v480
    %v483 = vpack.c.bf16 %v481, %v481
    %484 = vmatprep.subr.bf16.mxu0 %v337
    %485 = vmatpush1.bf16.msra.mxu0 %v336
    %486 = vmatprep.subr.bf16.mxu0 %v335
    %487 = vmatpush1.bf16.msra.mxu0 %v334
    %488 = vmatprep.subr.bf16.mxu0 %v333
    %489 = vmatpush1.bf16.msra.mxu0 %v332
    %490 = vmatprep.subr.bf16.mxu0 %v331
    %491 = vmatpush1.bf16.msra.mxu0 %v330
    %492 = vmatprep.subr.bf16.mxu0 %v329
    %493 = vmatpush1.bf16.msra.mxu0 %v328
    %494 = vmatprep.subr.bf16.mxu0 %v327
    %495 = vmatpush1.bf16.msra.mxu0 %v326
    %496 = vmatprep.subr.bf16.mxu0 %v325
    %497 = vmatpush1.bf16.msra.mxu0 %v324
    %498 = vmatprep.subr.bf16.mxu0 %v323
    %499 = vmatpush1.bf16.msra.mxu0 %v322
    %500 = vmatprep.subr.bf16.mxu0 %v353
    %501 = vmatpush2.bf16.msra.mxu0 %v352
    %502 = vmatprep.subr.bf16.mxu0 %v351
    %503 = vmatpush2.bf16.msra.mxu0 %v350
    %504 = vmatprep.subr.bf16.mxu0 %v349
    %505 = vmatpush2.bf16.msra.mxu0 %v348
    %506 = vmatprep.subr.bf16.mxu0 %v347
    %507 = vmatpush2.bf16.msra.mxu0 %v346
    %508 = vmatprep.subr.bf16.mxu0 %v345
    %509 = vmatpush2.bf16.msra.mxu0 %v344
    %510 = vmatprep.subr.bf16.mxu0 %v343
    %511 = vmatpush2.bf16.msra.mxu0 %v342
    %512 = vmatprep.subr.bf16.mxu0 %v341
    %513 = vmatpush2.bf16.msra.mxu0 %v340
    %514 = vmatprep.subr.bf16.mxu0 %v339
    %515 = vmatpush2.bf16.msra.mxu0 %v338
    %516 = vmatprep.mubr.bf16.mxu0 %v483
    %517 = vmatmul.mubr.bf16.gmra.mxu0 %v482
    %v518 = vpop.f32.mrf.mxu0
    %v519 = vadd.f32 %v219, %v518
    %v520 = vpop.f32.mrf.mxu0
    %v521 = vadd.f32 %v223, %v520
    %v522 = vpop.f32.mrf.mxu0
    %v523 = vpop.f32.mrf.mxu0
    %524 = vdwg.mxu0
    %v525 = vtanh.pop %v519
    %v526 = vtanh.pop %v521
    %v527 = vmul.f32 %v525, 0.25
    %v528 = vmul.f32 %v526, 0.25
    %v529 = vadd.f32 %v480, %v527
    %v530 = vadd.f32 %v481, %v528
    %v531 = vpack.c.bf16 %v529, %v529
    %v532 = vpack.c.bf16 %v530, %v530
    %533 = vmatprep.subr.bf16.mxu0 %v337
    %534 = vmatpush1.bf16.msra.mxu0 %v336
    %535 = vmatprep.subr.bf16.mxu0 %v335
    %536 = vmatpush1.bf16.msra.mxu0 %v334
    %537 = vmatprep.subr.bf16.mxu0 %v333
    %538 = vmatpush1.bf16.msra.mxu0 %v332
    %539 = vmatprep.subr.bf16.mxu0 %v331
    %540 = vmatpush1.bf16.msra.mxu0 %v330
    %541 = vmatprep.subr.bf16.mxu0 %v329
    %542 = vmatpush1.bf16.msra.mxu0 %v328
    %543 = vmatprep.subr.bf16.mxu0 %v327
    %544 = vmatpush1.bf16.msra.mxu0 %v326
    %545 = vmatprep.subr.bf16.mxu0 %v325
    %546 = vmatpush1.bf16.msra.mxu0 %v324
    %547 = vmatprep.subr.bf16.mxu0 %v323
    %548 = vmatpush1.bf16.msra.mxu0 %v322
    %549 = vmatprep.subr.bf16.mxu0 %v353
    %550 = vmatpush2.bf16.msra.mxu0 %v352
    %551 = vmatprep.subr.bf16.mxu0 %v351
    %552 = vmatpush2.bf16.msra.mxu0 %v350
    %553 = vmatprep.subr.bf16.mxu0 %v349
    %554 = vmatpush2.bf16.msra.mxu0 %v348
    %555 = vmatprep.subr.bf16.mxu0 %v347
    %556 = vmatpush2.bf16.msra.mxu0 %v346
    %557 = vmatprep.subr.bf16.mxu0 %v345
    %558 = vmatpush2.bf16.msra.mxu0 %v344
    %559 = vmatprep.subr.bf16.mxu0 %v343
    %560 = vmatpush2.bf16.msra.mxu0 %v342
    %561 = vmatprep.subr.bf16.mxu0 %v341
    %562 = vmatpush2.bf16.msra.mxu0 %v340
    %563 = vmatprep.subr.bf16.mxu0 %v339
    %564 = vmatpush2.bf16.msra.mxu0 %v338
    %565 = vmatprep.mubr.bf16.mxu0 %v532
    %566 = vmatmul.mubr.bf16.gmra.mxu0 %v531
    %v567 = vpop.f32.mrf.mxu0
    %v568 = vadd.f32 %v219, %v567
    %v569 = vpop.f32.mrf.mxu0
    %v570 = vadd.f32 %v223, %v569
    %v571 = vpop.f32.mrf.mxu0
    %v572 = vpop.f32.mrf.mxu0
    %573 = vdwg.mxu0
    %v574 = vtanh.pop %v568
    %v575 = vtanh.pop %v570
    %v576 = vmul.f32 %v574, 0.25
    %v577 = vmul.f32 %v575, 0.25
    %v578 = vadd.f32 %v529, %v576
    %v579 = vadd.f32 %v530, %v577
    %v580 = vpack.c.bf16 %v578, %v578
    %v581 = vpack.c.bf16 %v579, %v579
    %v582 = vld [vmem:[#allocation8] sm:$0xf]
    %v583 = vld [vmem:[#allocation8 + $0x4] sm:$0xf]
    %v584 = vld [vmem:[#allocation8 + $0x8] sm:$0xf]
    %v585 = vld [vmem:[#allocation8 + $0xc] sm:$0xf]
    %v586 = vld [vmem:[#allocation8 + $0x10] sm:$0xf]
    %v587 = vld [vmem:[#allocation8 + $0x14] sm:$0xf]
    %v588 = vld [vmem:[#allocation8 + $0x18] sm:$0xf]
    %v589 = vld [vmem:[#allocation8 + $0x1c] sm:$0xf]
    %v590 = vld [vmem:[#allocation8 + $0x20] sm:$0xf]
    %v591 = vld [vmem:[#allocation8 + $0x24] sm:$0xf]
    %v592 = vld [vmem:[#allocation8 + $0x28] sm:$0xf]
    %v593 = vld [vmem:[#allocation8 + $0x2c] sm:$0xf]
    %v594 = vld [vmem:[#allocation8 + $0x30] sm:$0xf]
    %v595 = vld [vmem:[#allocation8 + $0x34] sm:$0xf]
    %v596 = vld [vmem:[#allocation8 + $0x38] sm:$0xf]
    %v597 = vld [vmem:[#allocation8 + $0x3c] sm:$0xf]
    %v598 = vld [vmem:[#allocation8 + $0x40] sm:$0xf]
    %v599 = vld [vmem:[#allocation8 + $0x44] sm:$0xf]
    %v600 = vld [vmem:[#allocation8 + $0x48] sm:$0xf]
    %v601 = vld [vmem:[#allocation8 + $0x4c] sm:$0xf]
    %v602 = vld [vmem:[#allocation8 + $0x50] sm:$0xf]
    %v603 = vld [vmem:[#allocation8 + $0x54] sm:$0xf]
    %v604 = vld [vmem:[#allocation8 + $0x58] sm:$0xf]
    %v605 = vld [vmem:[#allocation8 + $0x5c] sm:$0xf]
    %v606 = vld [vmem:[#allocation8 + $0x60] sm:$0xf]
    %v607 = vld [vmem:[#allocation8 + $0x64] sm:$0xf]
    %v608 = vld [vmem:[#allocation8 + $0x68] sm:$0xf]
    %v609 = vld [vmem:[#allocation8 + $0x6c] sm:$0xf]
    %v610 = vld [vmem:[#allocation8 + $0x70] sm:$0xf]
    %v611 = vld [vmem:[#allocation8 + $0x74] sm:$0xf]
    %v612 = vld [vmem:[#allocation8 + $0x78] sm:$0xf]
    %v613 = vld [vmem:[#allocation8 + $0x7c] sm:$0xf]
    %v614 = vld [vmem:[%s6] sm:$0x1]
    %v616 = vlaneseq
    %v617 = vshrl.u32 %v616, 7
    %v618 = vsub.s32 0, %v617
    %v619 = vrot.slane %v614, %v618
    %v653 = vunpack.c.l.b16 %v582
    %v654 = vunpack.c.l.b16 %v583
    %v655 = vunpack.c.l.b16 %v584
    %v656 = vunpack.c.l.b16 %v585
    %v657 = vunpack.c.l.b16 %v586
    %v658 = vunpack.c.l.b16 %v587
    %v659 = vunpack.c.l.b16 %v588
    %v660 = vunpack.c.l.b16 %v589
    %v661 = vunpack.c.l.b16 %v590
    %v662 = vunpack.c.l.b16 %v591
    %v663 = vunpack.c.l.b16 %v592
    %v664 = vunpack.c.l.b16 %v593
    %v665 = vunpack.c.l.b16 %v594
    %v666 = vunpack.c.l.b16 %v595
    %v667 = vunpack.c.l.b16 %v596
    %v668 = vunpack.c.l.b16 %v597
    %v669 = vunpack.c.l.b16 %v598
    %v670 = vunpack.c.l.b16 %v599
    %v671 = vunpack.c.l.b16 %v600
    %v672 = vunpack.c.l.b16 %v601
    %v673 = vunpack.c.l.b16 %v602
    %v674 = vunpack.c.l.b16 %v603
    %v675 = vunpack.c.l.b16 %v604
    %v676 = vunpack.c.l.b16 %v605
    %v677 = vunpack.c.l.b16 %v606
    %v678 = vunpack.c.l.b16 %v607
    %v679 = vunpack.c.l.b16 %v608
    %v680 = vunpack.c.l.b16 %v609
    %v681 = vunpack.c.l.b16 %v610
    %v682 = vunpack.c.l.b16 %v611
    %v683 = vunpack.c.l.b16 %v612
    %v684 = vunpack.c.l.b16 %v613
    %v685 = vpack.c.b16 %v654, %v653
    %v686 = vpack.c.b16 %v656, %v655
    %v687 = vpack.c.b16 %v658, %v657
    %v688 = vpack.c.b16 %v660, %v659
    %v689 = vpack.c.b16 %v662, %v661
    %v690 = vpack.c.b16 %v664, %v663
    %v691 = vpack.c.b16 %v666, %v665
    %v692 = vpack.c.b16 %v668, %v667
    %v693 = vpack.c.b16 %v670, %v669
    %v694 = vpack.c.b16 %v672, %v671
    %v695 = vpack.c.b16 %v674, %v673
    %v696 = vpack.c.b16 %v676, %v675
    %v697 = vpack.c.b16 %v678, %v677
    %v698 = vpack.c.b16 %v680, %v679
    %v699 = vpack.c.b16 %v682, %v681
    %v700 = vpack.c.b16 %v684, %v683
    %717 = vmatprep.subr.bf16.mxu0 0
    %718 = vmatpush1.bf16.msra.mxu0 %v692
    %719 = vmatprep.subr.bf16.mxu0 0
    %720 = vmatpush1.bf16.msra.mxu0 %v691
    %721 = vmatprep.subr.bf16.mxu0 0
    %722 = vmatpush1.bf16.msra.mxu0 %v690
    %723 = vmatprep.subr.bf16.mxu0 0
    %724 = vmatpush1.bf16.msra.mxu0 %v689
    %725 = vmatprep.subr.bf16.mxu0 0
    %726 = vmatpush1.bf16.msra.mxu0 %v688
    %727 = vmatprep.subr.bf16.mxu0 0
    %728 = vmatpush1.bf16.msra.mxu0 %v687
    %729 = vmatprep.subr.bf16.mxu0 0
    %730 = vmatpush1.bf16.msra.mxu0 %v686
    %731 = vmatprep.subr.bf16.mxu0 0
    %732 = vmatpush1.bf16.msra.mxu0 %v685
    %733 = vmatprep.subr.bf16.mxu0 0
    %734 = vmatpush2.bf16.msra.mxu0 %v700
    %735 = vmatprep.subr.bf16.mxu0 0
    %736 = vmatpush2.bf16.msra.mxu0 %v699
    %737 = vmatprep.subr.bf16.mxu0 0
    %738 = vmatpush2.bf16.msra.mxu0 %v698
    %739 = vmatprep.subr.bf16.mxu0 0
    %740 = vmatpush2.bf16.msra.mxu0 %v697
    %741 = vmatprep.subr.bf16.mxu0 0
    %742 = vmatpush2.bf16.msra.mxu0 %v696
    %743 = vmatprep.subr.bf16.mxu0 0
    %744 = vmatpush2.bf16.msra.mxu0 %v695
    %745 = vmatprep.subr.bf16.mxu0 0
    %746 = vmatpush2.bf16.msra.mxu0 %v694
    %747 = vmatprep.subr.bf16.mxu0 0
    %748 = vmatpush2.bf16.msra.mxu0 %v693
    %749 = vmatprep.mubr.bf16.mxu0 %v581
    %750 = vmatmul.mubr.bf16.gmra.mxu0 %v580
    %v751 = vpop.f32.mrf.mxu0
    %v752 = vadd.f32 %v619, %v751
    %v753 = vpop.f32.mrf.mxu0
    %v754 = vpop.f32.mrf.mxu0
    %v755 = vpop.f32.mrf.mxu0
    %756 = vdwg.mxu0
    %757 = vst [vmem:[#allocation10] sm:$0xff] %v752
    // Predicated region
    $region46: #{tpu_custom_call.1} parent=1 // pred_check
      _
    $region47: #{tpu_custom_call.1} parent=1 // pred_check_branch
      %759 = sbr.rel (0) target = $region49
    $region48: #{tpu_custom_call.1} parent=1 // pred_region
      %s761 = ssub.s32 128, 128
      %762 = vsyncadd [#allocation4], %s761
      %s764 = sshll.u32 [#allocation10], 4
      %s765 = int_to_ptr.vmem [resolvable:$true] %s764
      %767 = dma.vmem_to_hbm [thread:$0]  %s765, 128, %s7, [#allocation4]
    $region49: #{tpu_custom_call.1} parent=1 // pred_fallthru
      _
    // Predicated region
    $region50: #{tpu_custom_call.1} parent=1 // pred_check
      _
    $region51: #{tpu_custom_call.1} parent=1 // pred_check_branch
      %769 = sbr.rel (0) target = $region53
    $region52: #{tpu_custom_call.1} parent=1 // pred_region
      %770 = dma.done [#allocation4], 128
    $region53: #{tpu_custom_call.1} parent=1 // pred_fallthru
      _
    %771 = vsyncpa [#allocation3], 1
    %772 = vsyncpa [#allocation6], 1
    %773 = vsyncpa [#allocation9], 1
    %774 = vsyncpa [#allocation4], 1

</llo_original>
